<compile_context>
chip_gen: v7x
topology: tpu7x:2x2x1
jax: 0.10.0
libtpu: 0.0.40
codegen_flags: <defaults>
</compile_context>

<pallas_src>
import numpy as np
import jax
import jax.numpy as jnp
from jax.experimental import pallas as pl
from jax.experimental.pallas import tpu as pltpu

NEG_SLOPE = 0.01          # nn.LeakyReLU default negative_slope
SUBLANE = 8
LANE = 128
CONTRACT_ALIGN = 16       # bf16 sublane packing: contraction dims need only 16
VMEM_SMALL_PATH_BYTES = 20 * 1024 * 1024   # headroom under 32 MiB scoped default


def _round_up(x, m):
    return ((x + m - 1) // m) * m


# ---------------------------------------------------------------------------
# Kernels
# ---------------------------------------------------------------------------
def _bottleneck_kernel_small(x_ref, w1_ref, w2_ref, o_ref):
    """grid=() path: every key of one bucket in a single invocation.

    x_ref : [B_pad, F_red]         bf16 (column F is the constant-1 bias col)
    w1_ref: [K, F_red, HID_red]    bf16 (row F carries b1; W1[F, HID_red-1]=1)
    w2_ref: [K, HID_red, OUT_pad]  bf16 (row HID_red-1 carries b2)
    o_ref : [K, B_pad, OUT_pad]    bf16
    """
    x = x_ref[...]
    for k in range(w1_ref.shape[0]):          # static unroll; K is small here
        h = jnp.dot(x, w1_ref[k], preferred_element_type=jnp.float32)
        h = jnp.where(h > 0, h, NEG_SLOPE * h)            # LeakyReLU in f32
        o = jnp.dot(h.astype(jnp.bfloat16), w2_ref[k],
                    preferred_element_type=jnp.float32)
        o_ref[k] = o.astype(o_ref.dtype)


def _bottleneck_kernel_gridded(x_ref, w1_ref, w2_ref, o_ref):
    """grid=(K,) path: one key per step, weight slabs double-buffered."""
    h = jnp.dot(x_ref[...], w1_ref[...], preferred_element_type=jnp.float32)
    h = jnp.where(h > 0, h, NEG_SLOPE * h)
    o = jnp.dot(h.astype(jnp.bfloat16), w2_ref[...],
                preferred_element_type=jnp.float32)
    o_ref[...] = o.astype(o_ref.dtype)


def run_bucket(x_pad, w1_stack, w2_stack, small_k_threshold):
    """Run one bucket (all keys sharing the same padded OUT width)."""
    n_keys, f_red, hid_red = w1_stack.shape
    out_pad = w2_stack.shape[2]
    b_pad = x_pad.shape[0]
    out_shape = jax.ShapeDtypeStruct((n_keys, b_pad, out_pad), jnp.bfloat16)

    vmem_bytes = 2 * (x_pad.size + w1_stack.size + w2_stack.size
                      + n_keys * b_pad * out_pad)
    if n_keys <= small_k_threshold and vmem_bytes < VMEM_SMALL_PATH_BYTES:
        # Collapse the key grid: a single pipeline step, all slabs resident.
        return pl.pallas_call(
            _bottleneck_kernel_small,
            out_shape=out_shape,
        )(x_pad, w1_stack, w2_stack)

    # Large-K path: BlockSpec double-buffers the per-key weight slabs so key
    # k+1's DMA overlaps key k's compute.  All keys in a bucket have the same
    # out_pad, so the "parallel" key axis is balanced across v7x's 2 TCs.
    return pl.pallas_call(
        _bottleneck_kernel_gridded,
        out_shape=out_shape,
        grid=(n_keys,),
        in_specs=[
            pl.BlockSpec((b_pad, f_red), lambda k: (0, 0)),        # resident
            pl.BlockSpec((None, f_red, hid_red), lambda k: (k, 0, 0)),
            pl.BlockSpec((None, hid_red, out_pad), lambda k: (k, 0, 0)),
        ],
        out_specs=pl.BlockSpec((None, b_pad, out_pad), lambda k: (k, 0, 0)),
        compiler_params=pltpu.CompilerParams(
            dimension_semantics=("parallel",)),
    )(x_pad, w1_stack, w2_stack)


# ---------------------------------------------------------------------------
# Module wrapper
# ---------------------------------------------------------------------------
class LightweightAdaptGeneratorPallas:
    """JAX/Pallas port of LightweightAdaptGenerator.forward."""

    def __init__(self, concept_features, layer_config, mid_dim=None, seed=0,
                 small_k_threshold=8):
        # layer_config: {key: {"out_dim": int, "n_layers": int}} mimics the
        # dim_name_dict built from the backbone scan.
        self.concept_features = concept_features
        self.keys = list(layer_config.keys())
        self.small_k_threshold = small_k_threshold
        self.bias_col = concept_features
        self.f_red = _round_up(concept_features + 1, CONTRACT_ALIGN)

        rng = np.random.default_rng(seed)
        self.params = {}                       # host-side numpy master copies
        for k, cfg in layer_config.items():
            out_dim, n_layers = int(cfg["out_dim"]), int(cfg["n_layers"])
            hid = max(1, min(mid_dim or 64, out_dim // 4))   # guard hid >= 1
            total_out = n_layers * out_dim
            self.params[k] = dict(
                w1=(rng.standard_normal((concept_features, hid)) * 0.02
                    ).astype(np.float32),
                b1=(rng.standard_normal((hid,)) * 0.02).astype(np.float32),
                w2=(rng.standard_normal((hid, total_out)) * 0.02
                    ).astype(np.float32),
                b2=(rng.standard_normal((total_out,)) * 0.02).astype(np.float32),
                hid=hid, out_dim=out_dim, n_layers=n_layers,
                total_out=total_out)

        # ---- bucket keys by padded output width (no global-max OUT pad) ----
        key_buckets = {}
        for k in self.keys:
            out_pad = _round_up(self.params[k]["total_out"], LANE)
            key_buckets.setdefault(out_pad, []).append(k)

        self.buckets = []          # python metadata (static under jit)
        bucket_weights = []        # device arrays, passed as jit arguments
        self.key_loc = {}          # key -> (bucket_idx, position)
        for bi, (out_pad, keys) in enumerate(sorted(key_buckets.items())):
            hid_red = _round_up(max(self.params[k]["hid"] for k in keys) + 1,
                                CONTRACT_ALIGN)
            bias_row = hid_red - 1
            kb = len(keys)
            w1_np = np.zeros((kb, self.f_red, hid_red), np.float32)
            w2_np = np.zeros((kb, hid_red, out_pad), np.float32)
            for pos, k in enumerate(keys):
                p = self.params[k]
                hid, tot = p["hid"], p["total_out"]
                w1_np[pos, :concept_features, :hid] = p["w1"]
                w1_np[pos, self.bias_col, :hid] = p["b1"]      # fold b1
                w1_np[pos, self.bias_col, bias_row] = 1.0      # const-1 hid lane
                w2_np[pos, :hid, :tot] = p["w2"]
                w2_np[pos, bias_row, :tot] = p["b2"]           # fold b2
                self.key_loc[k] = (bi, pos)
            # single upload per slab; bf16 halves the weight-DMA bytes
            bucket_weights.append((jnp.asarray(w1_np, dtype=jnp.bfloat16),
                                   jnp.asarray(w2_np, dtype=jnp.bfloat16)))
            self.buckets.append(dict(keys=keys, out_pad=out_pad,
                                     hid_red=hid_red))
        self.bucket_weights = tuple(bucket_weights)

        # One jitted graph: pad x, run every bucket's pallas_call, un-pad.
        self._forward = jax.jit(self._forward_impl)

    def _forward_impl(self, bucket_weights, concept_vector):
        B, F = concept_vector.shape
        b_pad = _round_up(max(B, 1), SUBLANE)
        # Stage the concept vector: zero-pad, inject constant-1 bias column,
        # cast to bf16 (MXU-native).  Padded batch rows produce garbage that
        # is sliced away below.
        x_pad = jnp.zeros((b_pad, self.f_red), jnp.float32)
        x_pad = x_pad.at[:B, :F].set(concept_vector)
        x_pad = x_pad.at[:, self.bias_col].set(1.0)
        x_pad = x_pad.astype(jnp.bfloat16)

        bucket_outs = []
        for bi in range(len(self.buckets)):
            w1_stack, w2_stack = bucket_weights[bi]
            bucket_outs.append(
                run_bucket(x_pad, w1_stack, w2_stack, self.small_k_threshold))

        adaptations = {}
        for k in self.keys:
            bi, pos = self.key_loc[k]
            p = self.params[k]
            out = bucket_outs[bi][pos, :B, :p["total_out"]]
            adaptations[k] = out.astype(jnp.float32).reshape(
                B, p["n_layers"], p["out_dim"])
        return adaptations

    def __call__(self, concept_vector):
        assert concept_vector.shape[1] == self.concept_features
        return self._forward(self.bucket_weights, concept_vector)


# ---------------------------------------------------------------------------
# Demo / correctness check
# ---------------------------------------------------------------------------
if __name__ == "__main__":
    B = 2
    CONCEPT_FEATURES = 32

    # Synthetic stand-in for the backbone scan: three target-layer groups.
    # "fc_128" and "output_256" share total_out=256, so they land in the same
    # bucket and exercise the multi-key-per-bucket path.
    layer_config = {
        "head_64": {"out_dim": 64, "n_layers": 1},
        "fc_128": {"out_dim": 128, "n_layers": 2},
        "output_256": {"out_dim": 256, "n_layers": 1},
    }

    concept_vector = jax.random.normal(
        jax.random.PRNGKey(0), (B, CONCEPT_FEATURES), jnp.float32)

    def reference(params):
        """Pure-JAX reference with the same precision policy (bf16 weights /
        activations on the MXU, f32 accumulation)."""
        x_bf = concept_vector.astype(jnp.bfloat16)
        refs = {}
        for k, p in params.items():
            w1 = jnp.asarray(p["w1"], jnp.bfloat16)
            b1 = jnp.asarray(p["b1"], jnp.bfloat16).astype(jnp.float32)
            w2 = jnp.asarray(p["w2"], jnp.bfloat16)
            b2 = jnp.asarray(p["b2"], jnp.bfloat16).astype(jnp.float32)
            h = jnp.dot(x_bf, w1, preferred_element_type=jnp.float32) + b1
            h = jnp.where(h > 0, h, NEG_SLOPE * h)
            o = jnp.dot(h.astype(jnp.bfloat16), w2,
                        preferred_element_type=jnp.float32) + b2
            refs[k] = o.reshape(B, p["n_layers"], p["out_dim"])
        return refs

    ok = True
    # threshold=8 -> collapsed grid=() kernels; threshold=0 -> gridded kernels.
    for thresh, tag in ((8, "collapsed-grid"), (0, "gridded")):
        gen = LightweightAdaptGeneratorPallas(
            CONCEPT_FEATURES, layer_config, mid_dim=None, seed=0,
            small_k_threshold=thresh)
        adaptations = gen(concept_vector)
        jax.block_until_ready(adaptations)
        refs = reference(gen.params)
        for k in gen.keys:
            got = np.asarray(adaptations[k], np.float32)
            want = np.asarray(refs[k], np.float32)
            if not np.allclose(got, want, atol=1e-3, rtol=2e-2):
                ok = False
                print(f"MISMATCH [{tag}] {k}: "
                      f"max_abs_err={np.abs(got - want).max():.3e}")

    if ok:
        print("KERNEL_OK")
</pallas_src>

<mosaic_0001>
module attributes {stable_mosaic.version = 11 : i64} {
  func.func @_bottleneck_kernel_small(%arg0: memref<8x48xbf16, #tpu.memory_space<vmem>>, %arg1: memref<2x48x80xbf16, #tpu.memory_space<vmem>>, %arg2: memref<2x80x256xbf16, #tpu.memory_space<vmem>>, %arg3: memref<2x8x256xbf16, #tpu.memory_space<vmem>>) attributes {dimension_semantics = [], scalar_prefetch = 0 : i64, scratch_operands = 0 : i64, tpu.core_type = #tpu.core_type<tc>} {
    %c0 = arith.constant 0 : index
    %c0_0 = arith.constant 0 : index
    %0 = vector.load %arg0[%c0, %c0_0] : memref<8x48xbf16, #tpu.memory_space<vmem>>, vector<8x48xbf16>
    %c0_1 = arith.constant 0 : index
    %c0_2 = arith.constant 0 : index
    %c0_3 = arith.constant 0 : index
    %1 = vector.load %arg1[%c0_1, %c0_2, %c0_3] : memref<2x48x80xbf16, #tpu.memory_space<vmem>>, vector<1x48x80xbf16>
    %2 = vector.shape_cast %1 : vector<1x48x80xbf16> to vector<48x80xbf16>
    %cst = arith.constant dense<0.000000e+00> : vector<8x80xf32>
    %3 = tpu.matmul %0, %2, %cst {dimension_numbers = #tpu.dot_dimension_numbers<[1], [0], [0], [1], [0, 0, 1, 1], [], []>} : vector<8x48xbf16>, vector<48x80xbf16>, vector<8x80xf32> -> vector<8x80xf32>
    %cst_4 = arith.constant 0.000000e+00 : f32
    %4 = vector.broadcast %cst_4 : f32 to vector<8x80xf32>
    %5 = arith.cmpf ogt, %3, %4 : vector<8x80xf32>
    %cst_5 = arith.constant 0.00999999977 : f32
    %6 = vector.broadcast %cst_5 : f32 to vector<8x80xf32>
    %7 = arith.mulf %6, %3 : vector<8x80xf32>
    %8 = arith.select %5, %3, %7 : vector<8x80xi1>, vector<8x80xf32>
    %9 = arith.truncf %8 : vector<8x80xf32> to vector<8x80xbf16>
    %c0_6 = arith.constant 0 : index
    %c0_7 = arith.constant 0 : index
    %c0_8 = arith.constant 0 : index
    %10 = vector.load %arg2[%c0_6, %c0_7, %c0_8] : memref<2x80x256xbf16, #tpu.memory_space<vmem>>, vector<1x80x256xbf16>
    %11 = vector.shape_cast %10 : vector<1x80x256xbf16> to vector<80x256xbf16>
    %cst_9 = arith.constant dense<0.000000e+00> : vector<8x256xf32>
    %12 = tpu.matmul %9, %11, %cst_9 {dimension_numbers = #tpu.dot_dimension_numbers<[1], [0], [0], [1], [0, 0, 1, 1], [], []>} : vector<8x80xbf16>, vector<80x256xbf16>, vector<8x256xf32> -> vector<8x256xf32>
    %13 = arith.truncf %12 : vector<8x256xf32> to vector<8x256xbf16>
    %c0_10 = arith.constant 0 : index
    %c0_11 = arith.constant 0 : index
    %c0_12 = arith.constant 0 : index
    %14 = vector.load %arg3[%c0_10, %c0_11, %c0_12] : memref<2x8x256xbf16, #tpu.memory_space<vmem>>, vector<1x8x256xbf16>
    %15 = vector.shape_cast %14 : vector<1x8x256xbf16> to vector<8x256xbf16>
    %16 = vector.shape_cast %13 : vector<8x256xbf16> to vector<1x8x256xbf16>
    tpu.vector_store %arg3[%c0_10, %c0_11, %c0_12], %16 {strides = array<i32>} : memref<2x8x256xbf16, #tpu.memory_space<vmem>>, vector<1x8x256xbf16>,
    %c1 = arith.constant 1 : index
    %c0_13 = arith.constant 0 : index
    %c0_14 = arith.constant 0 : index
    %17 = vector.load %arg1[%c1, %c0_13, %c0_14] : memref<2x48x80xbf16, #tpu.memory_space<vmem>>, vector<1x48x80xbf16>
    %18 = vector.shape_cast %17 : vector<1x48x80xbf16> to vector<48x80xbf16>
    %cst_15 = arith.constant dense<0.000000e+00> : vector<8x80xf32>
    %19 = tpu.matmul %0, %18, %cst_15 {dimension_numbers = #tpu.dot_dimension_numbers<[1], [0], [0], [1], [0, 0, 1, 1], [], []>} : vector<8x48xbf16>, vector<48x80xbf16>, vector<8x80xf32> -> vector<8x80xf32>
    %cst_16 = arith.constant 0.000000e+00 : f32
    %20 = vector.broadcast %cst_16 : f32 to vector<8x80xf32>
    %21 = arith.cmpf ogt, %19, %20 : vector<8x80xf32>
    %cst_17 = arith.constant 0.00999999977 : f32
    %22 = vector.broadcast %cst_17 : f32 to vector<8x80xf32>
    %23 = arith.mulf %22, %19 : vector<8x80xf32>
    %24 = arith.select %21, %19, %23 : vector<8x80xi1>, vector<8x80xf32>
    %25 = arith.truncf %24 : vector<8x80xf32> to vector<8x80xbf16>
    %c1_18 = arith.constant 1 : index
    %c0_19 = arith.constant 0 : index
    %c0_20 = arith.constant 0 : index
    %26 = vector.load %arg2[%c1_18, %c0_19, %c0_20] : memref<2x80x256xbf16, #tpu.memory_space<vmem>>, vector<1x80x256xbf16>
    %27 = vector.shape_cast %26 : vector<1x80x256xbf16> to vector<80x256xbf16>
    %cst_21 = arith.constant dense<0.000000e+00> : vector<8x256xf32>
    %28 = tpu.matmul %25, %27, %cst_21 {dimension_numbers = #tpu.dot_dimension_numbers<[1], [0], [0], [1], [0, 0, 1, 1], [], []>} : vector<8x80xbf16>, vector<80x256xbf16>, vector<8x256xf32> -> vector<8x256xf32>
    %29 = arith.truncf %28 : vector<8x256xf32> to vector<8x256xbf16>
    %c1_22 = arith.constant 1 : index
    %c0_23 = arith.constant 0 : index
    %c0_24 = arith.constant 0 : index
    %30 = vector.load %arg3[%c1_22, %c0_23, %c0_24] : memref<2x8x256xbf16, #tpu.memory_space<vmem>>, vector<1x8x256xbf16>
    %31 = vector.shape_cast %30 : vector<1x8x256xbf16> to vector<8x256xbf16>
    %32 = vector.shape_cast %29 : vector<8x256xbf16> to vector<1x8x256xbf16>
    tpu.vector_store %arg3[%c1_22, %c0_23, %c0_24], %32 {strides = array<i32>} : memref<2x8x256xbf16, #tpu.memory_space<vmem>>, vector<1x8x256xbf16>,
    return
  }
}

module attributes {stable_mosaic.version = 11 : i64} {
  func.func @_bottleneck_kernel_small(%arg0: memref<8x48xbf16, #tpu.memory_space<vmem>>, %arg1: memref<1x48x32xbf16, #tpu.memory_space<vmem>>, %arg2: memref<1x32x128xbf16, #tpu.memory_space<vmem>>, %arg3: memref<1x8x128xbf16, #tpu.memory_space<vmem>>) attributes {dimension_semantics = [], scalar_prefetch = 0 : i64, scratch_operands = 0 : i64, tpu.core_type = #tpu.core_type<tc>} {
    %c0 = arith.constant 0 : index
    %c0_0 = arith.constant 0 : index
    %0 = vector.load %arg0[%c0, %c0_0] : memref<8x48xbf16, #tpu.memory_space<vmem>>, vector<8x48xbf16>
    %c0_1 = arith.constant 0 : index
    %c0_2 = arith.constant 0 : index
    %c0_3 = arith.constant 0 : index
    %1 = vector.load %arg1[%c0_1, %c0_2, %c0_3] : memref<1x48x32xbf16, #tpu.memory_space<vmem>>, vector<1x48x32xbf16>
    %2 = vector.shape_cast %1 : vector<1x48x32xbf16> to vector<48x32xbf16>
    %cst = arith.constant dense<0.000000e+00> : vector<8x32xf32>
    %3 = tpu.matmul %0, %2, %cst {dimension_numbers = #tpu.dot_dimension_numbers<[1], [0], [0], [1], [0, 0, 1, 1], [], []>} : vector<8x48xbf16>, vector<48x32xbf16>, vector<8x32xf32> -> vector<8x32xf32>
    %cst_4 = arith.constant 0.000000e+00 : f32
    %4 = vector.broadcast %cst_4 : f32 to vector<8x32xf32>
    %5 = arith.cmpf ogt, %3, %4 : vector<8x32xf32>
    %cst_5 = arith.constant 0.00999999977 : f32
    %6 = vector.broadcast %cst_5 : f32 to vector<8x32xf32>
    %7 = arith.mulf %6, %3 : vector<8x32xf32>
    %8 = arith.select %5, %3, %7 : vector<8x32xi1>, vector<8x32xf32>
    %9 = arith.truncf %8 : vector<8x32xf32> to vector<8x32xbf16>
    %c0_6 = arith.constant 0 : index
    %c0_7 = arith.constant 0 : index
    %c0_8 = arith.constant 0 : index
    %10 = vector.load %arg2[%c0_6, %c0_7, %c0_8] : memref<1x32x128xbf16, #tpu.memory_space<vmem>>, vector<1x32x128xbf16>
    %11 = vector.shape_cast %10 : vector<1x32x128xbf16> to vector<32x128xbf16>
    %cst_9 = arith.constant dense<0.000000e+00> : vector<8x128xf32>
    %12 = tpu.matmul %9, %11, %cst_9 {dimension_numbers = #tpu.dot_dimension_numbers<[1], [0], [0], [1], [0, 0, 1, 1], [], []>} : vector<8x32xbf16>, vector<32x128xbf16>, vector<8x128xf32> -> vector<8x128xf32>
    %13 = arith.truncf %12 : vector<8x128xf32> to vector<8x128xbf16>
    %c0_10 = arith.constant 0 : index
    %c0_11 = arith.constant 0 : index
    %c0_12 = arith.constant 0 : index
    %14 = vector.load %arg3[%c0_10, %c0_11, %c0_12] : memref<1x8x128xbf16, #tpu.memory_space<vmem>>, vector<1x8x128xbf16>
    %15 = vector.shape_cast %14 : vector<1x8x128xbf16> to vector<8x128xbf16>
    %16 = vector.shape_cast %13 : vector<8x128xbf16> to vector<1x8x128xbf16>
    tpu.vector_store %arg3[%c0_10, %c0_11, %c0_12], %16 {strides = array<i32>} : memref<1x8x128xbf16, #tpu.memory_space<vmem>>, vector<1x8x128xbf16>,
    return
  }
}

</mosaic_0001>

<llo_original>
// kernel: _forward_impl.2
$region0: #{_forward_impl.2}
  #allocation0 [shape = 'u32[]', space=smem, size = 0x4, offset = 0x4, fixed_abs, tag = 'smem constant byte address 0x4 - core index']
  #allocation1 [shape = 'u32[144,128]{1,0:T(1,128)}', space=vmem, size = 0x12000, scoped, tag = 'internal scratch']
  %s0 = inlined_call_operand.vmem [shape: bf16[8,48], index: 0, kind: input, shape index: {}]
  %s1 = inlined_call_operand.vmem [shape: bf16[1,48,32], index: 1, kind: input, shape index: {}]
  %s2 = inlined_call_operand.vmem [shape: bf16[1,32,128], index: 2, kind: input, shape index: {}]
  %s3 = inlined_call_operand.vmem [shape: bf16[1,8,128], index: 3, kind: output, shape index: {}]
  %s4 = sld [smem:[#allocation0]]
  $region22: #{_forward_impl.2} parent=0
    _
  %s6 = ssub.s32 1, %s4
  %s7 = scalar_select 0, %s6, %s4
  // Predicated region
  $region2: #{_forward_impl.2} parent=0 // pred_check
    _
  $region3: #{_forward_impl.2} parent=0 // pred_check_branch
    %9 = sbr.rel (0) target = $region5
  $region4: #{_forward_impl.2} parent=0 // pred_region
    _
  $region5: #{_forward_impl.2} parent=0 // pred_fallthru
    _
  // Predicated region
  $region6: #{_forward_impl.2} parent=0 // pred_check
    _
  $region7: #{_forward_impl.2} parent=0 // pred_check_branch
    %11 = sbr.rel (0) target = $region9
  $region8: #{_forward_impl.2} parent=0 // pred_region
    _
  $region9: #{_forward_impl.2} parent=0 // pred_fallthru
    _
  // Predicated region
  $region10: #{_forward_impl.2} parent=0 // pred_check
    _
  $region11: #{_forward_impl.2} parent=0 // pred_check_branch
    %13 = sbr.rel (0) target = $region13
  $region12: #{_forward_impl.2} parent=0 // pred_region
    _
  $region13: #{_forward_impl.2} parent=0 // pred_fallthru
    _
  %v15 = vld [vmem:[%s0] sm:$0xf]
  %v16 = vld [vmem:[%s1] sm:$0xf]
  %v17 = vld [vmem:[%s1 + $0x4] sm:$0xf]
  %v18 = vld [vmem:[%s1 + $0x8] sm:$0xf]
  %v19 = vld [vmem:[%s1 + $0xc] sm:$0xf]
  %v20 = vld [vmem:[%s1 + $0x10] sm:$0xf]
  %v21 = vld [vmem:[%s1 + $0x14] sm:$0xf]
  %v28 = vunpack.c.l.b16 %v16
  %v29 = vunpack.c.l.b16 %v17
  %v30 = vunpack.c.l.b16 %v18
  %v31 = vunpack.c.l.b16 %v19
  %v32 = vunpack.c.l.b16 %v20
  %v33 = vunpack.c.l.b16 %v21
  %v34 = vpack.c.b16 %v29, %v28
  %v35 = vpack.c.b16 %v31, %v30
  %v36 = vpack.c.b16 %v33, %v32
  %vm40 = vcmask 392192
  %v42 = vsel %vm40, %v15, 0
  %44 = vmatprep.subr.bf16.mxu0 0
  %45 = vmatpush1.bf16.msra.mxu0 %v34
  %46 = vmatprep.subr.bf16.mxu0 0
  %47 = vmatpush1.bf16.msra.mxu0 %v35
  %48 = vmatprep.subr.bf16.mxu0 0
  %49 = vmatpush1.bf16.msra.mxu0 %v36
  %50 = vmatprep.subr.bf16.mxu0 0
  %51 = vmatpush1.bf16.msra.mxu0 0
  %52 = vmatprep.subr.bf16.mxu0 0
  %53 = vmatpush1.bf16.msra.mxu0 0
  %54 = vmatprep.subr.bf16.mxu0 0
  %55 = vmatpush1.bf16.msra.mxu0 0
  %56 = vmatprep.subr.bf16.mxu0 0
  %57 = vmatpush1.bf16.msra.mxu0 0
  %58 = vmatprep.subr.bf16.mxu0 0
  %59 = vmatpush1.bf16.msra.mxu0 0
  %60 = vmatprep.subr.bf16.mxu0 0
  %61 = vmatpush1.bf16.msra.mxu0 0
  %62 = vmatprep.subr.bf16.mxu0 0
  %63 = vmatpush1.bf16.msra.mxu0 0
  %64 = vmatprep.subr.bf16.mxu0 0
  %65 = vmatpush1.bf16.msra.mxu0 0
  %66 = vmatprep.subr.bf16.mxu0 0
  %67 = vmatpush1.bf16.msra.mxu0 0
  %68 = vmatprep.subr.bf16.mxu0 0
  %69 = vmatpush1.bf16.msra.mxu0 0
  %70 = vmatprep.subr.bf16.mxu0 0
  %71 = vmatpush1.bf16.msra.mxu0 0
  %72 = vmatprep.subr.bf16.mxu0 0
  %73 = vmatpush1.bf16.msra.mxu0 0
  %74 = vmatprep.subr.bf16.mxu0 0
  %75 = vmatpush1.bf16.msra.mxu0 0
  %76 = vmatprep.mubr.bf16.mxu0 0
  %77 = vmatmul.mubr.bf16.gmra.mrb[0].mxu0 %v42
  %v78 = vpop.f32.mrb[0].mxu0
  %v79 = vadd.f32 0.0, %v78
  %v80 = vpop.f32.mrb[0].mxu0
  %v81 = vpop.f32.mrb[0].mxu0
  %v82 = vpop.f32.mrb[0].mxu0
  %83 = vdwg.mxu0
  %vm84 = vcmp.gt.f32.partialorder %v79, 0.0
  %v85 = vmul.f32 %v79, 0.01
  %v86 = vsel %vm84, %v79, %v85
  %v87 = vpack.c.bf16 %v86, %v86
  %v88 = vld [vmem:[%s2] sm:$0xf]
  %v89 = vld [vmem:[%s2 + $0x4] sm:$0xf]
  %v90 = vld [vmem:[%s2 + $0x8] sm:$0xf]
  %v91 = vld [vmem:[%s2 + $0xc] sm:$0xf]
  %v96 = vunpack.c.l.b16 %v88
  %v97 = vunpack.c.l.b16 %v89
  %v98 = vunpack.c.l.b16 %v90
  %v99 = vunpack.c.l.b16 %v91
  %v100 = vpack.c.b16 %v97, %v96
  %v101 = vpack.c.b16 %v99, %v98
  %vm104 = vcmask 261120
  %v106 = vsel %vm104, %v87, 0
  %108 = vmatprep.subr.bf16.mxu0 0
  %109 = vmatpush1.bf16.msra.mxu0 %v100
  %110 = vmatprep.subr.bf16.mxu0 0
  %111 = vmatpush1.bf16.msra.mxu0 %v101
  %112 = vmatprep.subr.bf16.mxu0 0
  %113 = vmatpush1.bf16.msra.mxu0 0
  %114 = vmatprep.subr.bf16.mxu0 0
  %115 = vmatpush1.bf16.msra.mxu0 0
  %116 = vmatprep.subr.bf16.mxu0 0
  %117 = vmatpush1.bf16.msra.mxu0 0
  %118 = vmatprep.subr.bf16.mxu0 0
  %119 = vmatpush1.bf16.msra.mxu0 0
  %120 = vmatprep.subr.bf16.mxu0 0
  %121 = vmatpush1.bf16.msra.mxu0 0
  %122 = vmatprep.subr.bf16.mxu0 0
  %123 = vmatpush1.bf16.msra.mxu0 0
  %124 = vmatprep.subr.bf16.mxu0 0
  %125 = vmatpush1.bf16.msra.mxu0 0
  %126 = vmatprep.subr.bf16.mxu0 0
  %127 = vmatpush1.bf16.msra.mxu0 0
  %128 = vmatprep.subr.bf16.mxu0 0
  %129 = vmatpush1.bf16.msra.mxu0 0
  %130 = vmatprep.subr.bf16.mxu0 0
  %131 = vmatpush1.bf16.msra.mxu0 0
  %132 = vmatprep.subr.bf16.mxu0 0
  %133 = vmatpush1.bf16.msra.mxu0 0
  %134 = vmatprep.subr.bf16.mxu0 0
  %135 = vmatpush1.bf16.msra.mxu0 0
  %136 = vmatprep.subr.bf16.mxu0 0
  %137 = vmatpush1.bf16.msra.mxu0 0
  %138 = vmatprep.subr.bf16.mxu0 0
  %139 = vmatpush1.bf16.msra.mxu0 0
  %140 = vmatprep.mubr.bf16.mxu0 0
  %141 = vmatmul.mubr.bf16.gmra.mrb[0].mxu0 %v106
  %v142 = vpop.f32.mrb[0].mxu0
  %v143 = vadd.f32 0.0, %v142
  %v144 = vpop.f32.mrb[0].mxu0
  %v145 = vpop.f32.mrb[0].mxu0
  %v146 = vpop.f32.mrb[0].mxu0
  %147 = vdwg.mxu0
  %v148 = vpack.c.bf16 %v143, %v143
  %149 = vst [vmem:[%s3] sm:$0xf] %v148
  // Predicated region
  $region14: #{_forward_impl.2} parent=0 // pred_check
    _
  $region15: #{_forward_impl.2} parent=0 // pred_check_branch
    %151 = sbr.rel (0) target = $region17
  $region16: #{_forward_impl.2} parent=0 // pred_region
    _
  $region17: #{_forward_impl.2} parent=0 // pred_fallthru
    _
  // Predicated region
  $region18: #{_forward_impl.2} parent=0 // pred_check
    _
  $region19: #{_forward_impl.2} parent=0 // pred_check_branch
    %153 = sbr.rel (0) target = $region21
  $region20: #{_forward_impl.2} parent=0 // pred_region
    _
  $region21: #{_forward_impl.2} parent=0 // pred_fallthru
    _

// kernel: _forward_impl.3
$region0: #{_forward_impl.3}
  #allocation0 [shape = 'u32[]', space=smem, size = 0x4, offset = 0x4, fixed_abs, tag = 'smem constant byte address 0x4 - core index']
  #allocation1 [shape = 'u32[144,128]{1,0:T(1,128)}', space=vmem, size = 0x12000, scoped, tag = 'internal scratch']
  %s0 = inlined_call_operand.vmem [shape: bf16[8,48], index: 0, kind: input, shape index: {}]
  %s1 = inlined_call_operand.hbm [shape: bf16[2,48,80], index: 1, kind: input, shape index: {}]
  %s2 = inlined_call_operand.hbm [shape: bf16[2,80,256], index: 2, kind: input, shape index: {}]
  %s3 = inlined_call_operand.vmem [shape: bf16[2,8,256], index: 3, kind: output, shape index: {}]
  %s4 = sld [smem:[#allocation0]]
  $region30: #{_forward_impl.3} parent=0
    _
  %s6 = ssub.s32 1, %s4
  %s7 = scalar_select 0, %s6, %s4
  $region1: #{_forward_impl.3} parent=0
    #allocation2 [shape = 'u8[24576]{0}', space=vmem, size = 0x6000, scoped, tag = 'input window, operand 1, single buffered']
    #allocation3 [shape = 's32[1]{0}', space=sflag, size = 0x4, scoped, tag = 'scoped memory for _forward_impl.3']
    #allocation4 [shape = 'u8[81920]{0}', space=vmem, size = 0x14000, scoped, tag = 'input window, operand 2, single buffered']
    #allocation5 [shape = 's32[1]{0}', space=sflag, size = 0x4, scoped, tag = 'scoped memory for _forward_impl.3']
    %8 = vsyncpa [#allocation3], 0
    %9 = vsyncpa [#allocation5], 0
    // Predicated region
    $region2: #{_forward_impl.3} parent=1 // pred_check
      _
    $region3: #{_forward_impl.3} parent=1 // pred_check_branch
      %11 = sbr.rel (0) target = $region5
    $region4: #{_forward_impl.3} parent=1 // pred_region
      _
    $region5: #{_forward_impl.3} parent=1 // pred_fallthru
      _
    // Predicated region
    $region6: #{_forward_impl.3} parent=1 // pred_check
      _
    $region7: #{_forward_impl.3} parent=1 // pred_check_branch
      %13 = sbr.rel (0) target = $region9
    $region8: #{_forward_impl.3} parent=1 // pred_region
      %s15 = ssub.s32 768, 768
      %16 = vsyncadd [#allocation3], %s15
      %s17 = sshll.u32 [#allocation2], 4
      %s18 = int_to_ptr.vmem [resolvable:$true] %s17
      %23 = dma.hbm_to_vmem [thread:$0]  %s1, 768, %s18, [#allocation3], 64, 64, 4
    $region9: #{_forward_impl.3} parent=1 // pred_fallthru
      _
    // Predicated region
    $region10: #{_forward_impl.3} parent=1 // pred_check
      _
    $region11: #{_forward_impl.3} parent=1 // pred_check_branch
      %25 = sbr.rel (0) target = $region13
    $region12: #{_forward_impl.3} parent=1 // pred_region
      %s27 = ssub.s32 2560, 2560
      %28 = vsyncadd [#allocation5], %s27
      %s29 = sshll.u32 [#allocation4], 4
      %s30 = int_to_ptr.vmem [resolvable:$true] %s29
      %35 = dma.hbm_to_vmem [thread:$0]  %s2, 2560, %s30, [#allocation5], 128, 128, 8
    $region13: #{_forward_impl.3} parent=1 // pred_fallthru
      _
    // Predicated region
    $region14: #{_forward_impl.3} parent=1 // pred_check
      _
    $region15: #{_forward_impl.3} parent=1 // pred_check_branch
      %37 = sbr.rel (0) target = $region17
    $region16: #{_forward_impl.3} parent=1 // pred_region
      %38 = dma.done [#allocation3], 768
    $region17: #{_forward_impl.3} parent=1 // pred_fallthru
      _
    // Predicated region
    $region18: #{_forward_impl.3} parent=1 // pred_check
      _
    $region19: #{_forward_impl.3} parent=1 // pred_check_branch
      %40 = sbr.rel (0) target = $region21
    $region20: #{_forward_impl.3} parent=1 // pred_region
      %41 = dma.done [#allocation5], 2560
    $region21: #{_forward_impl.3} parent=1 // pred_fallthru
      _
    %v43 = vld [vmem:[%s0] sm:$0xf]
    %v44 = vld [vmem:[#allocation2] sm:$0xf]
    %v45 = vld [vmem:[#allocation2 + $0x4] sm:$0xf]
    %v46 = vld [vmem:[#allocation2 + $0x8] sm:$0xf]
    %v47 = vld [vmem:[#allocation2 + $0xc] sm:$0xf]
    %v48 = vld [vmem:[#allocation2 + $0x10] sm:$0xf]
    %v49 = vld [vmem:[#allocation2 + $0x14] sm:$0xf]
    %v56 = vunpack.c.l.b16 %v44
    %v57 = vunpack.c.l.b16 %v45
    %v58 = vunpack.c.l.b16 %v46
    %v59 = vunpack.c.l.b16 %v47
    %v60 = vunpack.c.l.b16 %v48
    %v61 = vunpack.c.l.b16 %v49
    %v62 = vpack.c.b16 %v57, %v56
    %v63 = vpack.c.b16 %v59, %v58
    %v64 = vpack.c.b16 %v61, %v60
    %vm68 = vcmask 392192
    %v70 = vsel %vm68, %v43, 0
    %72 = vmatprep.subr.bf16.mxu0 0
    %73 = vmatpush1.bf16.msra.mxu0 %v62
    %74 = vmatprep.subr.bf16.mxu0 0
    %75 = vmatpush1.bf16.msra.mxu0 %v63
    %76 = vmatprep.subr.bf16.mxu0 0
    %77 = vmatpush1.bf16.msra.mxu0 %v64
    %78 = vmatprep.subr.bf16.mxu0 0
    %79 = vmatpush1.bf16.msra.mxu0 0
    %80 = vmatprep.subr.bf16.mxu0 0
    %81 = vmatpush1.bf16.msra.mxu0 0
    %82 = vmatprep.subr.bf16.mxu0 0
    %83 = vmatpush1.bf16.msra.mxu0 0
    %84 = vmatprep.subr.bf16.mxu0 0
    %85 = vmatpush1.bf16.msra.mxu0 0
    %86 = vmatprep.subr.bf16.mxu0 0
    %87 = vmatpush1.bf16.msra.mxu0 0
    %88 = vmatprep.subr.bf16.mxu0 0
    %89 = vmatpush1.bf16.msra.mxu0 0
    %90 = vmatprep.subr.bf16.mxu0 0
    %91 = vmatpush1.bf16.msra.mxu0 0
    %92 = vmatprep.subr.bf16.mxu0 0
    %93 = vmatpush1.bf16.msra.mxu0 0
    %94 = vmatprep.subr.bf16.mxu0 0
    %95 = vmatpush1.bf16.msra.mxu0 0
    %96 = vmatprep.subr.bf16.mxu0 0
    %97 = vmatpush1.bf16.msra.mxu0 0
    %98 = vmatprep.subr.bf16.mxu0 0
    %99 = vmatpush1.bf16.msra.mxu0 0
    %100 = vmatprep.subr.bf16.mxu0 0
    %101 = vmatpush1.bf16.msra.mxu0 0
    %102 = vmatprep.subr.bf16.mxu0 0
    %103 = vmatpush1.bf16.msra.mxu0 0
    %104 = vmatprep.mubr.bf16.mxu0 0
    %105 = vmatmul.mubr.bf16.gmra.mrb[0].mxu0 %v70
    %v106 = vpop.f32.mrb[0].mxu0
    %v107 = vadd.f32 0.0, %v106
    %v108 = vpop.f32.mrb[0].mxu0
    %v109 = vpop.f32.mrb[0].mxu0
    %v110 = vpop.f32.mrb[0].mxu0
    %111 = vdwg.mxu0
    %vm112 = vcmp.gt.f32.partialorder %v107, 0.0
    %v113 = vmul.f32 %v107, 0.01
    %v114 = vsel %vm112, %v107, %v113
    %v115 = vpack.c.bf16 %v114, %v114
    %v116 = vld [vmem:[#allocation4] sm:$0xff]
    %v117 = vld [vmem:[#allocation4 + $0x8] sm:$0xff]
    %v118 = vld [vmem:[#allocation4 + $0x10] sm:$0xff]
    %v119 = vld [vmem:[#allocation4 + $0x18] sm:$0xff]
    %v120 = vld [vmem:[#allocation4 + $0x20] sm:$0xff]
    %v121 = vld [vmem:[#allocation4 + $0x28] sm:$0xff]
    %v122 = vld [vmem:[#allocation4 + $0x30] sm:$0xff]
    %v123 = vld [vmem:[#allocation4 + $0x38] sm:$0xff]
    %v124 = vld [vmem:[#allocation4 + $0x40] sm:$0xff]
    %v125 = vld [vmem:[#allocation4 + $0x48] sm:$0xff]
    %v136 = vunpack.c.l.b16 %v116
    %v137 = vunpack.c.h.b16 %v116
    %v138 = vunpack.c.l.b16 %v117
    %v139 = vunpack.c.h.b16 %v117
    %v140 = vunpack.c.l.b16 %v118
    %v141 = vunpack.c.h.b16 %v118
    %v142 = vunpack.c.l.b16 %v119
    %v143 = vunpack.c.h.b16 %v119
    %v144 = vunpack.c.l.b16 %v120
    %v145 = vunpack.c.h.b16 %v120
    %v146 = vunpack.c.l.b16 %v121
    %v147 = vunpack.c.h.b16 %v121
    %v148 = vunpack.c.l.b16 %v122
    %v149 = vunpack.c.h.b16 %v122
    %v150 = vunpack.c.l.b16 %v123
    %v151 = vunpack.c.h.b16 %v123
    %v152 = vunpack.c.l.b16 %v124
    %v153 = vunpack.c.h.b16 %v124
    %v154 = vunpack.c.l.b16 %v125
    %v155 = vunpack.c.h.b16 %v125
    %v156 = vpack.c.b16 %v138, %v136
    %v157 = vpack.c.b16 %v139, %v137
    %v158 = vpack.c.b16 %v142, %v140
    %v159 = vpack.c.b16 %v143, %v141
    %v160 = vpack.c.b16 %v146, %v144
    %v161 = vpack.c.b16 %v147, %v145
    %v162 = vpack.c.b16 %v150, %v148
    %v163 = vpack.c.b16 %v151, %v149
    %v164 = vpack.c.b16 %v154, %v152
    %v165 = vpack.c.b16 %v155, %v153
    %vm176 = vcmask 654336
    %v178 = vsel %vm176, %v115, 0
    %180 = vmatprep.subr.bf16.mxu0 %v157
    %181 = vmatpush1.bf16.msra.mxu0 %v156
    %182 = vmatprep.subr.bf16.mxu0 %v159
    %183 = vmatpush1.bf16.msra.mxu0 %v158
    %184 = vmatprep.subr.bf16.mxu0 %v161
    %185 = vmatpush1.bf16.msra.mxu0 %v160
    %186 = vmatprep.subr.bf16.mxu0 %v163
    %187 = vmatpush1.bf16.msra.mxu0 %v162
    %188 = vmatprep.subr.bf16.mxu0 %v165
    %189 = vmatpush1.bf16.msra.mxu0 %v164
    %190 = vmatprep.subr.bf16.mxu0 0
    %191 = vmatpush1.bf16.msra.mxu0 0
    %192 = vmatprep.subr.bf16.mxu0 0
    %193 = vmatpush1.bf16.msra.mxu0 0
    %194 = vmatprep.subr.bf16.mxu0 0
    %195 = vmatpush1.bf16.msra.mxu0 0
    %196 = vmatprep.subr.bf16.mxu0 0
    %197 = vmatpush1.bf16.msra.mxu0 0
    %198 = vmatprep.subr.bf16.mxu0 0
    %199 = vmatpush1.bf16.msra.mxu0 0
    %200 = vmatprep.subr.bf16.mxu0 0
    %201 = vmatpush1.bf16.msra.mxu0 0
    %202 = vmatprep.subr.bf16.mxu0 0
    %203 = vmatpush1.bf16.msra.mxu0 0
    %204 = vmatprep.subr.bf16.mxu0 0
    %205 = vmatpush1.bf16.msra.mxu0 0
    %206 = vmatprep.subr.bf16.mxu0 0
    %207 = vmatpush1.bf16.msra.mxu0 0
    %208 = vmatprep.subr.bf16.mxu0 0
    %209 = vmatpush1.bf16.msra.mxu0 0
    %210 = vmatprep.subr.bf16.mxu0 0
    %211 = vmatpush1.bf16.msra.mxu0 0
    %212 = vmatprep.mubr.bf16.mxu0 0
    %213 = vmatmul.mubr.bf16.gmra.mrb[0].mxu0 %v178
    %v214 = vpop.f32.mrb[0].mxu0
    %v215 = vadd.f32 0.0, %v214
    %v216 = vpop.f32.mrb[0].mxu0
    %v217 = vadd.f32 0.0, %v216
    %v218 = vpop.f32.mrb[0].mxu0
    %v219 = vpop.f32.mrb[0].mxu0
    %220 = vdwg.mxu0
    %v221 = vpack.c.bf16 %v215, %v215
    %v222 = vpack.c.bf16 %v217, %v217
    %v225 = vunpack.c.l.b16 %v221
    %v226 = vunpack.c.l.b16 %v222
    %v227 = vpack.c.b16 %v226, %v225
    %229 = vst [vmem:[%s3] sm:$0xff] %v227
    %s230 = scalar_lea.vmem [#allocation2], 24
    %v231 = vld [vmem:[%s230] sm:$0xf]
    %v232 = vld [vmem:[%s230 + $0x4] sm:$0xf]
    %v233 = vld [vmem:[%s230 + $0x8] sm:$0xf]
    %v234 = vld [vmem:[%s230 + $0xc] sm:$0xf]
    %v235 = vld [vmem:[%s230 + $0x10] sm:$0xf]
    %v236 = vld [vmem:[%s230 + $0x14] sm:$0xf]
    %v243 = vunpack.c.l.b16 %v231
    %v244 = vunpack.c.l.b16 %v232
    %v245 = vunpack.c.l.b16 %v233
    %v246 = vunpack.c.l.b16 %v234
    %v247 = vunpack.c.l.b16 %v235
    %v248 = vunpack.c.l.b16 %v236
    %v249 = vpack.c.b16 %v244, %v243
    %v250 = vpack.c.b16 %v246, %v245
    %v251 = vpack.c.b16 %v248, %v247
    %255 = vmatprep.subr.bf16.mxu0 0
    %256 = vmatpush1.bf16.msra.mxu0 %v249
    %257 = vmatprep.subr.bf16.mxu0 0
    %258 = vmatpush1.bf16.msra.mxu0 %v250
    %259 = vmatprep.subr.bf16.mxu0 0
    %260 = vmatpush1.bf16.msra.mxu0 %v251
    %261 = vmatprep.subr.bf16.mxu0 0
    %262 = vmatpush1.bf16.msra.mxu0 0
    %263 = vmatprep.subr.bf16.mxu0 0
    %264 = vmatpush1.bf16.msra.mxu0 0
    %265 = vmatprep.subr.bf16.mxu0 0
    %266 = vmatpush1.bf16.msra.mxu0 0
    %267 = vmatprep.subr.bf16.mxu0 0
    %268 = vmatpush1.bf16.msra.mxu0 0
    %269 = vmatprep.subr.bf16.mxu0 0
    %270 = vmatpush1.bf16.msra.mxu0 0
    %271 = vmatprep.subr.bf16.mxu0 0
    %272 = vmatpush1.bf16.msra.mxu0 0
    %273 = vmatprep.subr.bf16.mxu0 0
    %274 = vmatpush1.bf16.msra.mxu0 0
    %275 = vmatprep.subr.bf16.mxu0 0
    %276 = vmatpush1.bf16.msra.mxu0 0
    %277 = vmatprep.subr.bf16.mxu0 0
    %278 = vmatpush1.bf16.msra.mxu0 0
    %279 = vmatprep.subr.bf16.mxu0 0
    %280 = vmatpush1.bf16.msra.mxu0 0
    %281 = vmatprep.subr.bf16.mxu0 0
    %282 = vmatpush1.bf16.msra.mxu0 0
    %283 = vmatprep.subr.bf16.mxu0 0
    %284 = vmatpush1.bf16.msra.mxu0 0
    %285 = vmatprep.subr.bf16.mxu0 0
    %286 = vmatpush1.bf16.msra.mxu0 0
    %287 = vmatprep.mubr.bf16.mxu0 0
    %288 = vmatmul.mubr.bf16.gmra.mrb[0].mxu0 %v70
    %v289 = vpop.f32.mrb[0].mxu0
    %v290 = vadd.f32 0.0, %v289
    %v291 = vpop.f32.mrb[0].mxu0
    %v292 = vpop.f32.mrb[0].mxu0
    %v293 = vpop.f32.mrb[0].mxu0
    %294 = vdwg.mxu0
    %vm295 = vcmp.gt.f32.partialorder %v290, 0.0
    %v296 = vmul.f32 %v290, 0.01
    %v297 = vsel %vm295, %v290, %v296
    %v298 = vpack.c.bf16 %v297, %v297
    %s299 = scalar_lea.vmem [#allocation4], 80
    %v300 = vld [vmem:[%s299] sm:$0xff]
    %v301 = vld [vmem:[%s299 + $0x8] sm:$0xff]
    %v302 = vld [vmem:[%s299 + $0x10] sm:$0xff]
    %v303 = vld [vmem:[%s299 + $0x18] sm:$0xff]
    %v304 = vld [vmem:[%s299 + $0x20] sm:$0xff]
    %v305 = vld [vmem:[%s299 + $0x28] sm:$0xff]
    %v306 = vld [vmem:[%s299 + $0x30] sm:$0xff]
    %v307 = vld [vmem:[%s299 + $0x38] sm:$0xff]
    %v308 = vld [vmem:[%s299 + $0x40] sm:$0xff]
    %v309 = vld [vmem:[%s299 + $0x48] sm:$0xff]
    %v320 = vunpack.c.l.b16 %v300
    %v321 = vunpack.c.h.b16 %v300
    %v322 = vunpack.c.l.b16 %v301
    %v323 = vunpack.c.h.b16 %v301
    %v324 = vunpack.c.l.b16 %v302
    %v325 = vunpack.c.h.b16 %v302
    %v326 = vunpack.c.l.b16 %v303
    %v327 = vunpack.c.h.b16 %v303
    %v328 = vunpack.c.l.b16 %v304
    %v329 = vunpack.c.h.b16 %v304
    %v330 = vunpack.c.l.b16 %v305
    %v331 = vunpack.c.h.b16 %v305
    %v332 = vunpack.c.l.b16 %v306
    %v333 = vunpack.c.h.b16 %v306
    %v334 = vunpack.c.l.b16 %v307
    %v335 = vunpack.c.h.b16 %v307
    %v336 = vunpack.c.l.b16 %v308
    %v337 = vunpack.c.h.b16 %v308
    %v338 = vunpack.c.l.b16 %v309
    %v339 = vunpack.c.h.b16 %v309
    %v340 = vpack.c.b16 %v322, %v320
    %v341 = vpack.c.b16 %v323, %v321
    %v342 = vpack.c.b16 %v326, %v324
    %v343 = vpack.c.b16 %v327, %v325
    %v344 = vpack.c.b16 %v330, %v328
    %v345 = vpack.c.b16 %v331, %v329
    %v346 = vpack.c.b16 %v334, %v332
    %v347 = vpack.c.b16 %v335, %v333
    %v348 = vpack.c.b16 %v338, %v336
    %v349 = vpack.c.b16 %v339, %v337
    %v361 = vsel %vm176, %v298, 0
    %363 = vmatprep.subr.bf16.mxu0 %v341
    %364 = vmatpush1.bf16.msra.mxu0 %v340
    %365 = vmatprep.subr.bf16.mxu0 %v343
    %366 = vmatpush1.bf16.msra.mxu0 %v342
    %367 = vmatprep.subr.bf16.mxu0 %v345
    %368 = vmatpush1.bf16.msra.mxu0 %v344
    %369 = vmatprep.subr.bf16.mxu0 %v347
    %370 = vmatpush1.bf16.msra.mxu0 %v346
    %371 = vmatprep.subr.bf16.mxu0 %v349
    %372 = vmatpush1.bf16.msra.mxu0 %v348
    %373 = vmatprep.subr.bf16.mxu0 0
    %374 = vmatpush1.bf16.msra.mxu0 0
    %375 = vmatprep.subr.bf16.mxu0 0
    %376 = vmatpush1.bf16.msra.mxu0 0
    %377 = vmatprep.subr.bf16.mxu0 0
    %378 = vmatpush1.bf16.msra.mxu0 0
    %379 = vmatprep.subr.bf16.mxu0 0
    %380 = vmatpush1.bf16.msra.mxu0 0
    %381 = vmatprep.subr.bf16.mxu0 0
    %382 = vmatpush1.bf16.msra.mxu0 0
    %383 = vmatprep.subr.bf16.mxu0 0
    %384 = vmatpush1.bf16.msra.mxu0 0
    %385 = vmatprep.subr.bf16.mxu0 0
    %386 = vmatpush1.bf16.msra.mxu0 0
    %387 = vmatprep.subr.bf16.mxu0 0
    %388 = vmatpush1.bf16.msra.mxu0 0
    %389 = vmatprep.subr.bf16.mxu0 0
    %390 = vmatpush1.bf16.msra.mxu0 0
    %391 = vmatprep.subr.bf16.mxu0 0
    %392 = vmatpush1.bf16.msra.mxu0 0
    %393 = vmatprep.subr.bf16.mxu0 0
    %394 = vmatpush1.bf16.msra.mxu0 0
    %395 = vmatprep.mubr.bf16.mxu0 0
    %396 = vmatmul.mubr.bf16.gmra.mrb[0].mxu0 %v361
    %v397 = vpop.f32.mrb[0].mxu0
    %v398 = vadd.f32 0.0, %v397
    %v399 = vpop.f32.mrb[0].mxu0
    %v400 = vadd.f32 0.0, %v399
    %v401 = vpop.f32.mrb[0].mxu0
    %v402 = vpop.f32.mrb[0].mxu0
    %403 = vdwg.mxu0
    %v404 = vpack.c.bf16 %v398, %v398
    %v405 = vpack.c.bf16 %v400, %v400
    %v408 = vunpack.c.l.b16 %v404
    %v409 = vunpack.c.l.b16 %v405
    %v410 = vpack.c.b16 %v409, %v408
    %s412 = scalar_lea.vmem %s3, 8
    %413 = vst [vmem:[%s412] sm:$0xff] %v410
    // Predicated region
    $region22: #{_forward_impl.3} parent=1 // pred_check
      _
    $region23: #{_forward_impl.3} parent=1 // pred_check_branch
      %415 = sbr.rel (0) target = $region25
    $region24: #{_forward_impl.3} parent=1 // pred_region
      _
    $region25: #{_forward_impl.3} parent=1 // pred_fallthru
      _
    // Predicated region
    $region26: #{_forward_impl.3} parent=1 // pred_check
      _
    $region27: #{_forward_impl.3} parent=1 // pred_check_branch
      %417 = sbr.rel (0) target = $region29
    $region28: #{_forward_impl.3} parent=1 // pred_region
      _
    $region29: #{_forward_impl.3} parent=1 // pred_fallthru
      _
    %418 = vsyncpa [#allocation3], 1
    %419 = vsyncpa [#allocation5], 1

</llo_original>
